<compile_context>
chip_gen: v7x
topology: tpu7x:2x2x1
jax: 0.10.0
libtpu: 0.0.40
codegen_flags: <defaults>
</compile_context>

<pallas_src>
import functools

import jax
import jax.numpy as jnp
from jax import lax
from jax.experimental import pallas as pl
from jax.experimental.pallas import tpu as pltpu


def gcn_fused_kernel(x_ref, a_ref, w1_ref, w3_ref, o_ref, *, order, bt):
    # x_ref : (Bt, T, N)          batch tile of the input, natural layout
    # a_ref : (N, N)              forward random-walk matrix A_q (A_h = A_q.T)
    # w1_ref: (H, 2*order*T)      GNN1.linear.weight (natural PyTorch layout, no bias)
    # w3_ref: (T, 2*order*H)      GNN3.linear.weight (natural PyTorch layout, no bias)
    # o_ref : (Bt, T, N)          output tile, natural layout
    n = a_ref.shape[0]
    t_dim = x_ref.shape[1]
    h_dim = w1_ref.shape[0]

    a = a_ref[...].astype(jnp.float32)                              # (N, N)
    # Pack the batch tile into matmul rows: (Bt, T, N) -> (Bt*T, N).
    z0 = x_ref[...].astype(jnp.float32).reshape(bt * t_dim, n)

    def gcn_conv(z_in, w, d_in):
        d_out = w.shape[0]
        # 1) Diffusion hops, batch-packed into a single MXU matmul per hop.
        #    Forward support  (A_q):        Z <- Z @ A^T  (contract A's axis 1)
        #    Backward support (A_h=A_q.T):  Z <- Z @ A    (contract A's axis 0)
        #    Hop order matches torch: [A_q^1..A_q^order, A_h^1..A_h^order].
        hops = []
        for a_axis in (1, 0):
            z = z_in
            for _ in range(order):
                z = lax.dot_general(z, a, (((1,), (a_axis,)), ((), ())),
                                    preferred_element_type=jnp.float32)
                hops.append(z)                                      # (Bt*d_in, N)
        # 2) Linear over the concatenated hop features, per batch element:
        #    out_b = W @ Z_cat_b  — one canonical matmul, contraction depth
        #    2*order*d_in (matches torch.cat(res, dim=2) column ordering).
        outs = []
        for b in range(bt):
            z_cat = jnp.concatenate(
                [z[b * d_in:(b + 1) * d_in, :] for z in hops], axis=0)
            out_b = lax.dot_general(w, z_cat, (((1,), (0,)), ((), ())),
                                    preferred_element_type=jnp.float32)
            outs.append(out_b)                                      # (d_out, N)
        return outs

    w1 = w1_ref[...].astype(jnp.float32)
    w3 = w3_ref[...].astype(jnp.float32)

    # ---- GNN1: T -> H ----
    l1 = gcn_conv(z0, w1, t_dim)
    z1 = l1[0] if bt == 1 else jnp.concatenate(l1, axis=0)          # (Bt*H, N)
    # (dropout between layers is identity in eval mode)
    # ---- GNN3: H -> T ----
    l2 = gcn_conv(z1, w3, h_dim)
    for b in range(bt):
        o_ref[b] = l2[b].astype(o_ref.dtype)                        # (T, N)


def gcn_forward(X, adj, w1, w3, order, *, batch_tile=None):
    """Full GCN.forward (eval mode).

    X  : (B, T, N, 1) or (B, T, N)
    adj: (N, N)   (2-D adjacency branch of the module: A_q = adj, A_h = adj.T)
    w1 : (H, 2*order*T) == GNN1.linear.weight  (natural PyTorch layout)
    w3 : (T, 2*order*H) == GNN3.linear.weight
    Returns [X_res] with X_res: (B, T, N).
    """
    if X.ndim == 4:
        X = jnp.squeeze(X, axis=-1)          # (B, T, N); trailing dim-1 squeeze is free
    B, T, N = X.shape
    H = w1.shape[0]
    assert w1.shape == (H, 2 * order * T)
    assert w3.shape == (T, 2 * order * H)

    bt = B if batch_tile is None else batch_tile
    assert B % bt == 0, "batch_tile must divide the batch size"

    kernel = functools.partial(gcn_fused_kernel, order=order, bt=bt)
    out = pl.pallas_call(
        kernel,
        out_shape=jax.ShapeDtypeStruct((B, T, N), X.dtype),
        grid=(B // bt,),
        in_specs=[
            pl.BlockSpec((bt, T, N), lambda i: (i, 0, 0)),
            # Adjacency / weights use constant index maps (fetched once, resident).
            # TODO(synk): for large N, row-tile the adjacency, single-buffer these
            # constant blocks (pipeline_mode=pl.Buffered(1)), store A/W as bf16 and
            # raise vmem_limit_bytes (v7x: 64 MiB VMEM, 32 MiB scoped default).
            pl.BlockSpec((N, N), lambda i: (0, 0)),
            pl.BlockSpec((H, 2 * order * T), lambda i: (0, 0)),
            pl.BlockSpec((T, 2 * order * H), lambda i: (0, 0)),
        ],
        out_specs=pl.BlockSpec((bt, T, N), lambda i: (i, 0, 0)),
        compiler_params=pltpu.CompilerParams(
            dimension_semantics=("parallel",)),
    )(X, adj, w1, w3)
    return [out]


# ---------------- pure-JAX reference (mirrors PyTorch semantics) --------------
def _gcn_conv_ref(x, a_q, a_h, w, order):
    res = []
    for A in (a_q, a_h):
        out = x
        for _ in range(order):
            out = jnp.einsum("ij,bjd->bid", A, out)
            res.append(out)
    cat = jnp.concatenate(res, axis=2)
    # nn.Linear(bias=False) with weight w of shape (out_dim, in_dim)
    return jnp.einsum("bnd,od->bno", cat, w)


def _gcn_forward_ref(X, adj, w1, w3, order):
    X = X[:, :, :, 0]
    A_q, A_h = adj, adj.T
    X_S = jnp.transpose(X, (0, 2, 1))
    X_s1 = _gcn_conv_ref(X_S, A_q, A_h, w1, order)
    X_s2 = _gcn_conv_ref(X_s1, A_q, A_h, w3, order)
    return jnp.transpose(X_s2, (0, 2, 1))


if __name__ == "__main__":
    B, T, N, H, order = 2, 8, 16, 32, 2

    key = jax.random.PRNGKey(0)
    k_x, k_adj, k_w1, k_w3 = jax.random.split(key, 4)

    # Input: (batch, num_timesteps, num_nodes, 1)
    X = jax.random.normal(k_x, (B, T, N, 1), dtype=jnp.float32)

    # Row-normalized random-walk adjacency (N, N)
    adj_raw = jax.random.uniform(k_adj, (N, N), dtype=jnp.float32)
    adj = adj_raw / jnp.sum(adj_raw, axis=1, keepdims=True)

    # Linear weights (bias=False) in natural PyTorch layout (out_dim, in_dim):
    # GNN1: Linear(2*order*T -> H);  GNN3: Linear(2*order*H -> T)
    w1 = jax.random.normal(k_w1, (H, 2 * order * T), dtype=jnp.float32) * 0.1
    w3 = jax.random.normal(k_w3, (T, 2 * order * H), dtype=jnp.float32) * 0.1

    out = gcn_forward(X, adj, w1, w3, order)[0]
    out = jax.block_until_ready(out)

    ref = _gcn_forward_ref(X, adj, w1, w3, order)
    assert out.shape == (B, T, N), out.shape
    assert jnp.allclose(out, ref, rtol=1e-5, atol=1e-5), "mismatch vs reference"

    print("KERNEL_OK")
</pallas_src>

<mosaic_0001>
module attributes {stable_mosaic.version = 11 : i64} {
  func.func @gcn_fused_kernel(%arg0: i32, %arg1: memref<2x8x16xf32, #tpu.memory_space<vmem>>, %arg2: memref<16x16xf32, #tpu.memory_space<vmem>>, %arg3: memref<32x32xf32, #tpu.memory_space<vmem>>, %arg4: memref<8x128xf32, #tpu.memory_space<vmem>>, %arg5: memref<2x8x16xf32, #tpu.memory_space<vmem>>) attributes {dimension_semantics = [#tpu.dimension_semantics<parallel>], iteration_bounds = array<i64: 1>, scalar_prefetch = 0 : i64, scratch_operands = 0 : i64, tpu.core_type = #tpu.core_type<tc>, window_params = [{transform_indices = @transform_0, window_bounds = array<i64: 2, 8, 16>}, {pipeline_mode = #tpu.pipeline_mode<synchronous>, transform_indices = @transform_1, window_bounds = array<i64: 16, 16>}, {pipeline_mode = #tpu.pipeline_mode<synchronous>, transform_indices = @transform_2, window_bounds = array<i64: 32, 32>}, {pipeline_mode = #tpu.pipeline_mode<synchronous>, transform_indices = @transform_3, window_bounds = array<i64: 8, 128>}, {transform_indices = @transform_4, window_bounds = array<i64: 2, 8, 16>}]} {
    %c0 = arith.constant 0 : index
    %c0_0 = arith.constant 0 : index
    %0 = vector.load %arg2[%c0, %c0_0] : memref<16x16xf32, #tpu.memory_space<vmem>>, vector<16x16xf32>
    %c0_1 = arith.constant 0 : index
    %c0_2 = arith.constant 0 : index
    %c0_3 = arith.constant 0 : index
    %1 = vector.load %arg1[%c0_1, %c0_2, %c0_3] : memref<2x8x16xf32, #tpu.memory_space<vmem>>, vector<2x8x16xf32>
    %2 = vector.shape_cast %1 : vector<2x8x16xf32> to vector<16x16xf32>
    %c0_4 = arith.constant 0 : index
    %c0_5 = arith.constant 0 : index
    %3 = vector.load %arg3[%c0_4, %c0_5] : memref<32x32xf32, #tpu.memory_space<vmem>>, vector<32x32xf32>
    %c0_6 = arith.constant 0 : index
    %c0_7 = arith.constant 0 : index
    %4 = vector.load %arg4[%c0_6, %c0_7] : memref<8x128xf32, #tpu.memory_space<vmem>>, vector<8x128xf32>
    %cst = arith.constant dense<0.000000e+00> : vector<16x16xf32>
    %5 = tpu.matmul %2, %0, %cst {dimension_numbers = #tpu.dot_dimension_numbers<[1], [1], [0], [0], [0, 0, 1, 0], [], []>} : vector<16x16xf32>, vector<16x16xf32>, vector<16x16xf32> -> vector<16x16xf32>
    %cst_8 = arith.constant dense<0.000000e+00> : vector<16x16xf32>
    %6 = tpu.matmul %5, %0, %cst_8 {dimension_numbers = #tpu.dot_dimension_numbers<[1], [1], [0], [0], [0, 0, 1, 0], [], []>} : vector<16x16xf32>, vector<16x16xf32>, vector<16x16xf32> -> vector<16x16xf32>
    %cst_9 = arith.constant dense<0.000000e+00> : vector<16x16xf32>
    %7 = tpu.matmul %2, %0, %cst_9 {dimension_numbers = #tpu.dot_dimension_numbers<[1], [0], [0], [1], [0, 0, 1, 1], [], []>} : vector<16x16xf32>, vector<16x16xf32>, vector<16x16xf32> -> vector<16x16xf32>
    %cst_10 = arith.constant dense<0.000000e+00> : vector<16x16xf32>
    %8 = tpu.matmul %7, %0, %cst_10 {dimension_numbers = #tpu.dot_dimension_numbers<[1], [0], [0], [1], [0, 0, 1, 1], [], []>} : vector<16x16xf32>, vector<16x16xf32>, vector<16x16xf32> -> vector<16x16xf32>
    %9 = vector.extract_strided_slice %5 {offsets = [0, 0], sizes = [8, 16], strides = [1, 1]} : vector<16x16xf32> to vector<8x16xf32>
    %10 = vector.extract_strided_slice %6 {offsets = [0, 0], sizes = [8, 16], strides = [1, 1]} : vector<16x16xf32> to vector<8x16xf32>
    %11 = vector.extract_strided_slice %7 {offsets = [0, 0], sizes = [8, 16], strides = [1, 1]} : vector<16x16xf32> to vector<8x16xf32>
    %12 = vector.extract_strided_slice %8 {offsets = [0, 0], sizes = [8, 16], strides = [1, 1]} : vector<16x16xf32> to vector<8x16xf32>
    %13 = tpu.concatenate %9, %10, %11, %12 in 0 : vector<8x16xf32>, vector<8x16xf32>, vector<8x16xf32>, vector<8x16xf32> -> vector<32x16xf32>
    %cst_11 = arith.constant dense<0.000000e+00> : vector<32x16xf32>
    %14 = tpu.matmul %3, %13, %cst_11 {dimension_numbers = #tpu.dot_dimension_numbers<[1], [0], [0], [1], [0, 0, 1, 1], [], []>} : vector<32x32xf32>, vector<32x16xf32>, vector<32x16xf32> -> vector<32x16xf32>
    %15 = vector.extract_strided_slice %5 {offsets = [8, 0], sizes = [8, 16], strides = [1, 1]} : vector<16x16xf32> to vector<8x16xf32>
    %16 = vector.extract_strided_slice %6 {offsets = [8, 0], sizes = [8, 16], strides = [1, 1]} : vector<16x16xf32> to vector<8x16xf32>
    %17 = vector.extract_strided_slice %7 {offsets = [8, 0], sizes = [8, 16], strides = [1, 1]} : vector<16x16xf32> to vector<8x16xf32>
    %18 = vector.extract_strided_slice %8 {offsets = [8, 0], sizes = [8, 16], strides = [1, 1]} : vector<16x16xf32> to vector<8x16xf32>
    %19 = tpu.concatenate %15, %16, %17, %18 in 0 : vector<8x16xf32>, vector<8x16xf32>, vector<8x16xf32>, vector<8x16xf32> -> vector<32x16xf32>
    %cst_12 = arith.constant dense<0.000000e+00> : vector<32x16xf32>
    %20 = tpu.matmul %3, %19, %cst_12 {dimension_numbers = #tpu.dot_dimension_numbers<[1], [0], [0], [1], [0, 0, 1, 1], [], []>} : vector<32x32xf32>, vector<32x16xf32>, vector<32x16xf32> -> vector<32x16xf32>
    %21 = tpu.concatenate %14, %20 in 0 : vector<32x16xf32>, vector<32x16xf32> -> vector<64x16xf32>
    %cst_13 = arith.constant dense<0.000000e+00> : vector<64x16xf32>
    %22 = tpu.matmul %21, %0, %cst_13 {dimension_numbers = #tpu.dot_dimension_numbers<[1], [1], [0], [0], [0, 0, 1, 0], [], []>} : vector<64x16xf32>, vector<16x16xf32>, vector<64x16xf32> -> vector<64x16xf32>
    %cst_14 = arith.constant dense<0.000000e+00> : vector<64x16xf32>
    %23 = tpu.matmul %22, %0, %cst_14 {dimension_numbers = #tpu.dot_dimension_numbers<[1], [1], [0], [0], [0, 0, 1, 0], [], []>} : vector<64x16xf32>, vector<16x16xf32>, vector<64x16xf32> -> vector<64x16xf32>
    %cst_15 = arith.constant dense<0.000000e+00> : vector<64x16xf32>
    %24 = tpu.matmul %21, %0, %cst_15 {dimension_numbers = #tpu.dot_dimension_numbers<[1], [0], [0], [1], [0, 0, 1, 1], [], []>} : vector<64x16xf32>, vector<16x16xf32>, vector<64x16xf32> -> vector<64x16xf32>
    %cst_16 = arith.constant dense<0.000000e+00> : vector<64x16xf32>
    %25 = tpu.matmul %24, %0, %cst_16 {dimension_numbers = #tpu.dot_dimension_numbers<[1], [0], [0], [1], [0, 0, 1, 1], [], []>} : vector<64x16xf32>, vector<16x16xf32>, vector<64x16xf32> -> vector<64x16xf32>
    %26 = vector.extract_strided_slice %22 {offsets = [0, 0], sizes = [32, 16], strides = [1, 1]} : vector<64x16xf32> to vector<32x16xf32>
    %27 = vector.extract_strided_slice %23 {offsets = [0, 0], sizes = [32, 16], strides = [1, 1]} : vector<64x16xf32> to vector<32x16xf32>
    %28 = vector.extract_strided_slice %24 {offsets = [0, 0], sizes = [32, 16], strides = [1, 1]} : vector<64x16xf32> to vector<32x16xf32>
    %29 = vector.extract_strided_slice %25 {offsets = [0, 0], sizes = [32, 16], strides = [1, 1]} : vector<64x16xf32> to vector<32x16xf32>
    %30 = tpu.concatenate %26, %27, %28, %29 in 0 : vector<32x16xf32>, vector<32x16xf32>, vector<32x16xf32>, vector<32x16xf32> -> vector<128x16xf32>
    %cst_17 = arith.constant dense<0.000000e+00> : vector<8x16xf32>
    %31 = tpu.matmul %4, %30, %cst_17 {dimension_numbers = #tpu.dot_dimension_numbers<[1], [0], [0], [1], [0, 0, 1, 1], [], []>} : vector<8x128xf32>, vector<128x16xf32>, vector<8x16xf32> -> vector<8x16xf32>
    %32 = vector.extract_strided_slice %22 {offsets = [32, 0], sizes = [32, 16], strides = [1, 1]} : vector<64x16xf32> to vector<32x16xf32>
    %33 = vector.extract_strided_slice %23 {offsets = [32, 0], sizes = [32, 16], strides = [1, 1]} : vector<64x16xf32> to vector<32x16xf32>
    %34 = vector.extract_strided_slice %24 {offsets = [32, 0], sizes = [32, 16], strides = [1, 1]} : vector<64x16xf32> to vector<32x16xf32>
    %35 = vector.extract_strided_slice %25 {offsets = [32, 0], sizes = [32, 16], strides = [1, 1]} : vector<64x16xf32> to vector<32x16xf32>
    %36 = tpu.concatenate %32, %33, %34, %35 in 0 : vector<32x16xf32>, vector<32x16xf32>, vector<32x16xf32>, vector<32x16xf32> -> vector<128x16xf32>
    %cst_18 = arith.constant dense<0.000000e+00> : vector<8x16xf32>
    %37 = tpu.matmul %4, %36, %cst_18 {dimension_numbers = #tpu.dot_dimension_numbers<[1], [0], [0], [1], [0, 0, 1, 1], [], []>} : vector<8x128xf32>, vector<128x16xf32>, vector<8x16xf32> -> vector<8x16xf32>
    %c0_19 = arith.constant 0 : index
    %c0_20 = arith.constant 0 : index
    %c0_21 = arith.constant 0 : index
    %38 = vector.load %arg5[%c0_19, %c0_20, %c0_21] : memref<2x8x16xf32, #tpu.memory_space<vmem>>, vector<1x8x16xf32>
    %39 = vector.shape_cast %38 : vector<1x8x16xf32> to vector<8x16xf32>
    %40 = vector.shape_cast %31 : vector<8x16xf32> to vector<1x8x16xf32>
    tpu.vector_store %arg5[%c0_19, %c0_20, %c0_21], %40 {strides = array<i32>} : memref<2x8x16xf32, #tpu.memory_space<vmem>>, vector<1x8x16xf32>,
    %c1 = arith.constant 1 : index
    %c0_22 = arith.constant 0 : index
    %c0_23 = arith.constant 0 : index
    %41 = vector.load %arg5[%c1, %c0_22, %c0_23] : memref<2x8x16xf32, #tpu.memory_space<vmem>>, vector<1x8x16xf32>
    %42 = vector.shape_cast %41 : vector<1x8x16xf32> to vector<8x16xf32>
    %43 = vector.shape_cast %37 : vector<8x16xf32> to vector<1x8x16xf32>
    tpu.vector_store %arg5[%c1, %c0_22, %c0_23], %43 {strides = array<i32>} : memref<2x8x16xf32, #tpu.memory_space<vmem>>, vector<1x8x16xf32>,
    return
  }
  func.func @transform_0(%arg0: i32) -> (i32, i32, i32) {
    %c0_i32 = arith.constant 0 : i32
    %c0_i32_0 = arith.constant 0 : i32
    %c0_i32_1 = arith.constant 0 : i32
    return %arg0, %c0_i32, %c0_i32_0 : i32, i32, i32
  }
  func.func @transform_1(%arg0: i32) -> (i32, i32) {
    %c0_i32 = arith.constant 0 : i32
    %c0_i32_0 = arith.constant 0 : i32
    %c0_i32_1 = arith.constant 0 : i32
    return %c0_i32, %c0_i32_0 : i32, i32
  }
  func.func @transform_2(%arg0: i32) -> (i32, i32) {
    %c0_i32 = arith.constant 0 : i32
    %c0_i32_0 = arith.constant 0 : i32
    %c0_i32_1 = arith.constant 0 : i32
    return %c0_i32, %c0_i32_0 : i32, i32
  }
  func.func @transform_3(%arg0: i32) -> (i32, i32) {
    %c0_i32 = arith.constant 0 : i32
    %c0_i32_0 = arith.constant 0 : i32
    %c0_i32_1 = arith.constant 0 : i32
    return %c0_i32, %c0_i32_0 : i32, i32
  }
  func.func @transform_4(%arg0: i32) -> (i32, i32, i32) {
    %c0_i32 = arith.constant 0 : i32
    %c0_i32_0 = arith.constant 0 : i32
    %c0_i32_1 = arith.constant 0 : i32
    return %arg0, %c0_i32, %c0_i32_0 : i32, i32, i32
  }
}

</mosaic_0001>

<llo_original>
// kernel: tpu_custom_call.1
$region0: #{tpu_custom_call.1}
  #allocation0 [shape = 'u32[]', space=smem, size = 0x4, offset = 0x4, fixed_abs, tag = 'smem constant byte address 0x4 - core index']
  #allocation1 [shape = 'u32[144,128]{1,0:T(1,128)}', space=vmem, size = 0x12000, scoped, tag = 'internal scratch']
  %s0 = inlined_call_operand.hbm [shape: f32[2,8,16], index: 0, kind: input, shape index: {}]
  %s1 = inlined_call_operand.hbm [shape: f32[16,16], index: 1, kind: input, shape index: {}]
  %s2 = inlined_call_operand.hbm [shape: f32[32,32], index: 2, kind: input, shape index: {}]
  %s3 = inlined_call_operand.vmem [shape: f32[8,128], index: 3, kind: input, shape index: {}]
  %s4 = inlined_call_operand.hbm [shape: f32[2,8,16], index: 4, kind: output, shape index: {}]
  %s5 = sld [smem:[#allocation0]]
  $region38: #{tpu_custom_call.1} parent=0
    _
  %s7 = ssub.s32 1, %s5
  %s8 = scalar_select 0, %s7, %s5
  $region1: #{tpu_custom_call.1} parent=0
    #allocation2 [shape = 'u8[8192]{0}', space=vmem, size = 0x2000, scoped, tag = 'input window, operand 0, single buffered']
    #allocation3 [shape = 's32[1]{0}', space=sflag, size = 0x4, scoped, tag = 'scoped memory for tpu_custom_call.1']
    #allocation4 [shape = 's32[1]{0}', space=sflag, size = 0x4, scoped, tag = 'scoped memory for tpu_custom_call.1']
    #allocation5 [shape = 'u8[8192]{0}', space=vmem, size = 0x2000, scoped, tag = 'input window, operand 1, single buffered']
    #allocation6 [shape = 's32[1]{0}', space=sflag, size = 0x4, scoped, tag = 'scoped memory for tpu_custom_call.1']
    #allocation7 [shape = 'u8[16384]{0}', space=vmem, size = 0x4000, scoped, tag = 'input window, operand 2, single buffered']
    #allocation8 [shape = 'u8[8192]{0}', space=vmem, size = 0x2000, scoped, tag = 'output window, operand 0, single buffered']
    %9 = vsyncpa [#allocation3], 0
    %10 = vsyncpa [#allocation6], 0
    %11 = vsyncpa [#allocation4], 0
    // Predicated region
    $region2: #{tpu_custom_call.1} parent=1 // pred_check
      _
    $region3: #{tpu_custom_call.1} parent=1 // pred_check_branch
      %13 = sbr.rel (0) target = $region5
    $region4: #{tpu_custom_call.1} parent=1 // pred_region
      %s15 = ssub.s32 256, 256
      %16 = vsyncadd [#allocation3], %s15
      %s17 = sshll.u32 [#allocation2], 4
      %s18 = int_to_ptr.vmem [resolvable:$true] %s17
      %23 = dma.hbm_to_vmem [thread:$0]  %s0, 256, %s18, [#allocation3], 128, 128, 8
    $region5: #{tpu_custom_call.1} parent=1 // pred_fallthru
      _
    // Predicated region
    $region6: #{tpu_custom_call.1} parent=1 // pred_check
      _
    $region7: #{tpu_custom_call.1} parent=1 // pred_check_branch
      %25 = sbr.rel (0) target = $region9
    $region8: #{tpu_custom_call.1} parent=1 // pred_region
      %s27 = ssub.s32 256, 256
      %28 = vsyncadd [#allocation6], %s27
      %s29 = sshll.u32 [#allocation5], 4
      %s30 = int_to_ptr.vmem [resolvable:$true] %s29
      %35 = dma.hbm_to_vmem [thread:$0]  %s1, 256, %s30, [#allocation6], 128, 128, 8
    $region9: #{tpu_custom_call.1} parent=1 // pred_fallthru
      _
    // Predicated region
    $region10: #{tpu_custom_call.1} parent=1 // pred_check
      _
    $region11: #{tpu_custom_call.1} parent=1 // pred_check_branch
      %37 = sbr.rel (0) target = $region13
    $region12: #{tpu_custom_call.1} parent=1 // pred_region
      %s39 = ssub.s32 512, 512
      %40 = vsyncadd [#allocation6], %s39
      %s41 = sshll.u32 [#allocation7], 4
      %s42 = int_to_ptr.vmem [resolvable:$true] %s41
      %47 = dma.hbm_to_vmem [thread:$0]  %s2, 512, %s42, [#allocation6], 128, 128, 8
    $region13: #{tpu_custom_call.1} parent=1 // pred_fallthru
      _
    // Predicated region
    $region14: #{tpu_custom_call.1} parent=1 // pred_check
      _
    $region15: #{tpu_custom_call.1} parent=1 // pred_check_branch
      %49 = sbr.rel (0) target = $region17
    $region16: #{tpu_custom_call.1} parent=1 // pred_region
      _
    $region17: #{tpu_custom_call.1} parent=1 // pred_fallthru
      _
    // Predicated region
    $region18: #{tpu_custom_call.1} parent=1 // pred_check
      _
    $region19: #{tpu_custom_call.1} parent=1 // pred_check_branch
      %51 = sbr.rel (0) target = $region21
    $region20: #{tpu_custom_call.1} parent=1 // pred_region
      %52 = dma.done [#allocation3], 256
    $region21: #{tpu_custom_call.1} parent=1 // pred_fallthru
      _
    // Predicated region
    $region22: #{tpu_custom_call.1} parent=1 // pred_check
      _
    $region23: #{tpu_custom_call.1} parent=1 // pred_check_branch
      %54 = sbr.rel (0) target = $region25
    $region24: #{tpu_custom_call.1} parent=1 // pred_region
      %55 = dma.done [#allocation6], 256
    $region25: #{tpu_custom_call.1} parent=1 // pred_fallthru
      _
    // Predicated region
    $region26: #{tpu_custom_call.1} parent=1 // pred_check
      _
    $region27: #{tpu_custom_call.1} parent=1 // pred_check_branch
      %57 = sbr.rel (0) target = $region29
    $region28: #{tpu_custom_call.1} parent=1 // pred_region
      %58 = dma.done [#allocation6], 512
    $region29: #{tpu_custom_call.1} parent=1 // pred_fallthru
      _
    %v59 = vld [vmem:[#allocation5] sm:$0xff]
    %v60 = vld [vmem:[#allocation5 + $0x8] sm:$0xff]
    %v61 = vld [vmem:[#allocation2] sm:$0xff]
    %v62 = vld [vmem:[#allocation2 + $0x8] sm:$0xff]
    %v63 = vld [vmem:[#allocation7] sm:$0xff]
    %v64 = vld [vmem:[#allocation7 + $0x8] sm:$0xff]
    %v65 = vld [vmem:[#allocation7 + $0x10] sm:$0xff]
    %v66 = vld [vmem:[#allocation7 + $0x18] sm:$0xff]
    %v67 = vld [vmem:[%s3] sm:$0xff]
    %vm68 = vcmask 130048
    %v70 = vsel %vm68, %v61, 0
    %v73 = vsel %vm68, %v62, 0
    %v76 = vsel %vm68, %v59, 0
    %v79 = vsel %vm68, %v60, 0
    %81 = vmatprep.subr.mxu0 0.0
    %82 = vmatpush1.xpose.msra.mxu0 %v76
    %83 = vmatprep.subr.mxu0 0.0
    %84 = vmatpush1.xpose.msra.mxu0 %v79
    %85 = vmatprep.subr.mxu0 0.0
    %86 = vmatpush1.xpose.msra.mxu0 0.0
    %87 = vmatprep.subr.mxu0 0.0
    %88 = vmatpush1.xpose.msra.mxu0 0.0
    %89 = vmatprep.subr.mxu0 0.0
    %90 = vmatpush1.xpose.msra.mxu0 0.0
    %91 = vmatprep.subr.mxu0 0.0
    %92 = vmatpush1.xpose.msra.mxu0 0.0
    %93 = vmatprep.subr.mxu0 0.0
    %94 = vmatpush1.xpose.msra.mxu0 0.0
    %95 = vmatprep.subr.mxu0 0.0
    %96 = vmatpush1.xpose.msra.mxu0 0.0
    %97 = vmatprep.subr.mxu0 0.0
    %98 = vmatpush1.xpose.msra.mxu0 0.0
    %99 = vmatprep.subr.mxu0 0.0
    %100 = vmatpush1.xpose.msra.mxu0 0.0
    %101 = vmatprep.subr.mxu0 0.0
    %102 = vmatpush1.xpose.msra.mxu0 0.0
    %103 = vmatprep.subr.mxu0 0.0
    %104 = vmatpush1.xpose.msra.mxu0 0.0
    %105 = vmatprep.subr.mxu0 0.0
    %106 = vmatpush1.xpose.msra.mxu0 0.0
    %107 = vmatprep.subr.mxu0 0.0
    %108 = vmatpush1.xpose.msra.mxu0 0.0
    %109 = vmatprep.subr.mxu0 0.0
    %110 = vmatpush1.xpose.msra.mxu0 0.0
    %111 = vmatprep.subr.mxu0 0.0
    %112 = vmatpush1.xpose.msra.mxu0 0.0
    %113 = vmatprep.subr.mxu0 0.0
    %114 = vmatpush1.xpose.msra.mxu0 0.0
    %115 = vmatprep.subr.mxu0 0.0
    %116 = vmatpush1.xpose.msra.mxu0 0.0
    %117 = vmatprep.subr.mxu0 0.0
    %118 = vmatpush1.xpose.msra.mxu0 0.0
    %119 = vmatprep.subr.mxu0 0.0
    %120 = vmatpush1.xpose.msra.mxu0 0.0
    %121 = vmatprep.subr.mxu0 0.0
    %122 = vmatpush1.xpose.msra.mxu0 0.0
    %123 = vmatprep.subr.mxu0 0.0
    %124 = vmatpush1.xpose.msra.mxu0 0.0
    %125 = vmatprep.subr.mxu0 0.0
    %126 = vmatpush1.xpose.msra.mxu0 0.0
    %127 = vmatprep.subr.mxu0 0.0
    %128 = vmatpush1.xpose.msra.mxu0 0.0
    %129 = vmatprep.subr.mxu0 0.0
    %130 = vmatpush1.xpose.msra.mxu0 0.0
    %131 = vmatprep.subr.mxu0 0.0
    %132 = vmatpush1.xpose.msra.mxu0 0.0
    %133 = vmatprep.subr.mxu0 0.0
    %134 = vmatpush1.xpose.msra.mxu0 0.0
    %135 = vmatprep.subr.mxu0 0.0
    %136 = vmatpush1.xpose.msra.mxu0 0.0
    %137 = vmatprep.subr.mxu0 0.0
    %138 = vmatpush1.xpose.msra.mxu0 0.0
    %139 = vmatprep.subr.mxu0 0.0
    %140 = vmatpush1.xpose.msra.mxu0 0.0
    %141 = vmatprep.subr.mxu0 0.0
    %142 = vmatpush1.xpose.msra.mxu0 0.0
    %143 = vmatprep.subr.mxu0 0.0
    %144 = vmatpush1.xpose.msra.mxu0 0.0
    %145 = vmatprep.mubr.f32.mxu0 0.0
    %146 = vmatmul.mubr.f32.gmra.mrb[0].mxu0 %v70
    %v147 = vpop.f32.mrb[0].mxu0
    %v148 = vadd.f32 0.0, %v147
    %v149 = vpop.f32.mrb[0].mxu0
    %150 = vmatprep.mubr.f32.mxu0 0.0
    %151 = vmatmul.mubr.f32.gmra.mrb[0].mxu0 %v73
    %v152 = vpop.f32.mrb[0].mxu0
    %v153 = vadd.f32 0.0, %v152
    %v154 = vpop.f32.mrb[0].mxu0
    %155 = vdwg.mxu0
    %v157 = vsel %vm68, %v148, 0
    %v160 = vsel %vm68, %v153, 0
    %162 = vmatprep.subr.mxu0 0.0
    %163 = vmatpush1.xpose.msra.mxu0 %v76
    %164 = vmatprep.subr.mxu0 0.0
    %165 = vmatpush1.xpose.msra.mxu0 %v79
    %166 = vmatprep.subr.mxu0 0.0
    %167 = vmatpush1.xpose.msra.mxu0 0.0
    %168 = vmatprep.subr.mxu0 0.0
    %169 = vmatpush1.xpose.msra.mxu0 0.0
    %170 = vmatprep.subr.mxu0 0.0
    %171 = vmatpush1.xpose.msra.mxu0 0.0
    %172 = vmatprep.subr.mxu0 0.0
    %173 = vmatpush1.xpose.msra.mxu0 0.0
    %174 = vmatprep.subr.mxu0 0.0
    %175 = vmatpush1.xpose.msra.mxu0 0.0
    %176 = vmatprep.subr.mxu0 0.0
    %177 = vmatpush1.xpose.msra.mxu0 0.0
    %178 = vmatprep.subr.mxu0 0.0
    %179 = vmatpush1.xpose.msra.mxu0 0.0
    %180 = vmatprep.subr.mxu0 0.0
    %181 = vmatpush1.xpose.msra.mxu0 0.0
    %182 = vmatprep.subr.mxu0 0.0
    %183 = vmatpush1.xpose.msra.mxu0 0.0
    %184 = vmatprep.subr.mxu0 0.0
    %185 = vmatpush1.xpose.msra.mxu0 0.0
    %186 = vmatprep.subr.mxu0 0.0
    %187 = vmatpush1.xpose.msra.mxu0 0.0
    %188 = vmatprep.subr.mxu0 0.0
    %189 = vmatpush1.xpose.msra.mxu0 0.0
    %190 = vmatprep.subr.mxu0 0.0
    %191 = vmatpush1.xpose.msra.mxu0 0.0
    %192 = vmatprep.subr.mxu0 0.0
    %193 = vmatpush1.xpose.msra.mxu0 0.0
    %194 = vmatprep.subr.mxu0 0.0
    %195 = vmatpush1.xpose.msra.mxu0 0.0
    %196 = vmatprep.subr.mxu0 0.0
    %197 = vmatpush1.xpose.msra.mxu0 0.0
    %198 = vmatprep.subr.mxu0 0.0
    %199 = vmatpush1.xpose.msra.mxu0 0.0
    %200 = vmatprep.subr.mxu0 0.0
    %201 = vmatpush1.xpose.msra.mxu0 0.0
    %202 = vmatprep.subr.mxu0 0.0
    %203 = vmatpush1.xpose.msra.mxu0 0.0
    %204 = vmatprep.subr.mxu0 0.0
    %205 = vmatpush1.xpose.msra.mxu0 0.0
    %206 = vmatprep.subr.mxu0 0.0
    %207 = vmatpush1.xpose.msra.mxu0 0.0
    %208 = vmatprep.subr.mxu0 0.0
    %209 = vmatpush1.xpose.msra.mxu0 0.0
    %210 = vmatprep.subr.mxu0 0.0
    %211 = vmatpush1.xpose.msra.mxu0 0.0
    %212 = vmatprep.subr.mxu0 0.0
    %213 = vmatpush1.xpose.msra.mxu0 0.0
    %214 = vmatprep.subr.mxu0 0.0
    %215 = vmatpush1.xpose.msra.mxu0 0.0
    %216 = vmatprep.subr.mxu0 0.0
    %217 = vmatpush1.xpose.msra.mxu0 0.0
    %218 = vmatprep.subr.mxu0 0.0
    %219 = vmatpush1.xpose.msra.mxu0 0.0
    %220 = vmatprep.subr.mxu0 0.0
    %221 = vmatpush1.xpose.msra.mxu0 0.0
    %222 = vmatprep.subr.mxu0 0.0
    %223 = vmatpush1.xpose.msra.mxu0 0.0
    %224 = vmatprep.subr.mxu0 0.0
    %225 = vmatpush1.xpose.msra.mxu0 0.0
    %226 = vmatprep.mubr.f32.mxu0 0.0
    %227 = vmatmul.mubr.f32.gmra.mrb[0].mxu0 %v157
    %v228 = vpop.f32.mrb[0].mxu0
    %v229 = vadd.f32 0.0, %v228
    %v230 = vpop.f32.mrb[0].mxu0
    %231 = vmatprep.mubr.f32.mxu0 0.0
    %232 = vmatmul.mubr.f32.gmra.mrb[0].mxu0 %v160
    %v233 = vpop.f32.mrb[0].mxu0
    %v234 = vadd.f32 0.0, %v233
    %v235 = vpop.f32.mrb[0].mxu0
    %236 = vdwg.mxu0
    %237 = vmatprep.subr.mxu0 0.0
    %238 = vmatpush1.msra.mxu0 %v59
    %239 = vmatprep.subr.mxu0 0.0
    %240 = vmatpush1.msra.mxu0 %v60
    %241 = vmatprep.subr.mxu0 0.0
    %242 = vmatpush1.msra.mxu0 0.0
    %243 = vmatprep.subr.mxu0 0.0
    %244 = vmatpush1.msra.mxu0 0.0
    %245 = vmatprep.subr.mxu0 0.0
    %246 = vmatpush1.msra.mxu0 0.0
    %247 = vmatprep.subr.mxu0 0.0
    %248 = vmatpush1.msra.mxu0 0.0
    %249 = vmatprep.subr.mxu0 0.0
    %250 = vmatpush1.msra.mxu0 0.0
    %251 = vmatprep.subr.mxu0 0.0
    %252 = vmatpush1.msra.mxu0 0.0
    %253 = vmatprep.subr.mxu0 0.0
    %254 = vmatpush1.msra.mxu0 0.0
    %255 = vmatprep.subr.mxu0 0.0
    %256 = vmatpush1.msra.mxu0 0.0
    %257 = vmatprep.subr.mxu0 0.0
    %258 = vmatpush1.msra.mxu0 0.0
    %259 = vmatprep.subr.mxu0 0.0
    %260 = vmatpush1.msra.mxu0 0.0
    %261 = vmatprep.subr.mxu0 0.0
    %262 = vmatpush1.msra.mxu0 0.0
    %263 = vmatprep.subr.mxu0 0.0
    %264 = vmatpush1.msra.mxu0 0.0
    %265 = vmatprep.subr.mxu0 0.0
    %266 = vmatpush1.msra.mxu0 0.0
    %267 = vmatprep.subr.mxu0 0.0
    %268 = vmatpush1.msra.mxu0 0.0
    %269 = vmatprep.subr.mxu0 0.0
    %270 = vmatpush1.msra.mxu0 0.0
    %271 = vmatprep.subr.mxu0 0.0
    %272 = vmatpush1.msra.mxu0 0.0
    %273 = vmatprep.subr.mxu0 0.0
    %274 = vmatpush1.msra.mxu0 0.0
    %275 = vmatprep.subr.mxu0 0.0
    %276 = vmatpush1.msra.mxu0 0.0
    %277 = vmatprep.subr.mxu0 0.0
    %278 = vmatpush1.msra.mxu0 0.0
    %279 = vmatprep.subr.mxu0 0.0
    %280 = vmatpush1.msra.mxu0 0.0
    %281 = vmatprep.subr.mxu0 0.0
    %282 = vmatpush1.msra.mxu0 0.0
    %283 = vmatprep.subr.mxu0 0.0
    %284 = vmatpush1.msra.mxu0 0.0
    %285 = vmatprep.subr.mxu0 0.0
    %286 = vmatpush1.msra.mxu0 0.0
    %287 = vmatprep.subr.mxu0 0.0
    %288 = vmatpush1.msra.mxu0 0.0
    %289 = vmatprep.subr.mxu0 0.0
    %290 = vmatpush1.msra.mxu0 0.0
    %291 = vmatprep.subr.mxu0 0.0
    %292 = vmatpush1.msra.mxu0 0.0
    %293 = vmatprep.subr.mxu0 0.0
    %294 = vmatpush1.msra.mxu0 0.0
    %295 = vmatprep.subr.mxu0 0.0
    %296 = vmatpush1.msra.mxu0 0.0
    %297 = vmatprep.subr.mxu0 0.0
    %298 = vmatpush1.msra.mxu0 0.0
    %299 = vmatprep.subr.mxu0 0.0
    %300 = vmatpush1.msra.mxu0 0.0
    %301 = vmatprep.mubr.f32.mxu0 0.0
    %302 = vmatmul.mubr.f32.gmra.mrb[0].mxu0 %v70
    %v303 = vpop.f32.mrb[0].mxu0
    %v304 = vadd.f32 0.0, %v303
    %v305 = vpop.f32.mrb[0].mxu0
    %306 = vmatprep.mubr.f32.mxu0 0.0
    %307 = vmatmul.mubr.f32.gmra.mrb[0].mxu0 %v73
    %v308 = vpop.f32.mrb[0].mxu0
    %v309 = vadd.f32 0.0, %v308
    %v310 = vpop.f32.mrb[0].mxu0
    %311 = vdwg.mxu0
    %v313 = vsel %vm68, %v304, 0
    %v316 = vsel %vm68, %v309, 0
    %318 = vmatprep.subr.mxu0 0.0
    %319 = vmatpush1.msra.mxu0 %v59
    %320 = vmatprep.subr.mxu0 0.0
    %321 = vmatpush1.msra.mxu0 %v60
    %322 = vmatprep.subr.mxu0 0.0
    %323 = vmatpush1.msra.mxu0 0.0
    %324 = vmatprep.subr.mxu0 0.0
    %325 = vmatpush1.msra.mxu0 0.0
    %326 = vmatprep.subr.mxu0 0.0
    %327 = vmatpush1.msra.mxu0 0.0
    %328 = vmatprep.subr.mxu0 0.0
    %329 = vmatpush1.msra.mxu0 0.0
    %330 = vmatprep.subr.mxu0 0.0
    %331 = vmatpush1.msra.mxu0 0.0
    %332 = vmatprep.subr.mxu0 0.0
    %333 = vmatpush1.msra.mxu0 0.0
    %334 = vmatprep.subr.mxu0 0.0
    %335 = vmatpush1.msra.mxu0 0.0
    %336 = vmatprep.subr.mxu0 0.0
    %337 = vmatpush1.msra.mxu0 0.0
    %338 = vmatprep.subr.mxu0 0.0
    %339 = vmatpush1.msra.mxu0 0.0
    %340 = vmatprep.subr.mxu0 0.0
    %341 = vmatpush1.msra.mxu0 0.0
    %342 = vmatprep.subr.mxu0 0.0
    %343 = vmatpush1.msra.mxu0 0.0
    %344 = vmatprep.subr.mxu0 0.0
    %345 = vmatpush1.msra.mxu0 0.0
    %346 = vmatprep.subr.mxu0 0.0
    %347 = vmatpush1.msra.mxu0 0.0
    %348 = vmatprep.subr.mxu0 0.0
    %349 = vmatpush1.msra.mxu0 0.0
    %350 = vmatprep.subr.mxu0 0.0
    %351 = vmatpush1.msra.mxu0 0.0
    %352 = vmatprep.subr.mxu0 0.0
    %353 = vmatpush1.msra.mxu0 0.0
    %354 = vmatprep.subr.mxu0 0.0
    %355 = vmatpush1.msra.mxu0 0.0
    %356 = vmatprep.subr.mxu0 0.0
    %357 = vmatpush1.msra.mxu0 0.0
    %358 = vmatprep.subr.mxu0 0.0
    %359 = vmatpush1.msra.mxu0 0.0
    %360 = vmatprep.subr.mxu0 0.0
    %361 = vmatpush1.msra.mxu0 0.0
    %362 = vmatprep.subr.mxu0 0.0
    %363 = vmatpush1.msra.mxu0 0.0
    %364 = vmatprep.subr.mxu0 0.0
    %365 = vmatpush1.msra.mxu0 0.0
    %366 = vmatprep.subr.mxu0 0.0
    %367 = vmatpush1.msra.mxu0 0.0
    %368 = vmatprep.subr.mxu0 0.0
    %369 = vmatpush1.msra.mxu0 0.0
    %370 = vmatprep.subr.mxu0 0.0
    %371 = vmatpush1.msra.mxu0 0.0
    %372 = vmatprep.subr.mxu0 0.0
    %373 = vmatpush1.msra.mxu0 0.0
    %374 = vmatprep.subr.mxu0 0.0
    %375 = vmatpush1.msra.mxu0 0.0
    %376 = vmatprep.subr.mxu0 0.0
    %377 = vmatpush1.msra.mxu0 0.0
    %378 = vmatprep.subr.mxu0 0.0
    %379 = vmatpush1.msra.mxu0 0.0
    %380 = vmatprep.subr.mxu0 0.0
    %381 = vmatpush1.msra.mxu0 0.0
    %382 = vmatprep.mubr.f32.mxu0 0.0
    %383 = vmatmul.mubr.f32.gmra.mrb[0].mxu0 %v313
    %v384 = vpop.f32.mrb[0].mxu0
    %v385 = vadd.f32 0.0, %v384
    %v386 = vpop.f32.mrb[0].mxu0
    %387 = vmatprep.mubr.f32.mxu0 0.0
    %388 = vmatmul.mubr.f32.gmra.mrb[0].mxu0 %v316
    %v389 = vpop.f32.mrb[0].mxu0
    %v390 = vadd.f32 0.0, %v389
    %v391 = vpop.f32.mrb[0].mxu0
    %392 = vdwg.mxu0
    %vm393 = vcmask 261120
    %v395 = vsel %vm393, %v63, 0
    %v398 = vsel %vm393, %v64, 0
    %v401 = vsel %vm393, %v65, 0
    %v404 = vsel %vm393, %v66, 0
    %406 = vmatprep.subr.mxu0 0.0
    %407 = vmatpush1.msra.mxu0 %v148
    %408 = vmatprep.subr.mxu0 0.0
    %409 = vmatpush1.msra.mxu0 %v229
    %410 = vmatprep.subr.mxu0 0.0
    %411 = vmatpush1.msra.mxu0 %v304
    %412 = vmatprep.subr.mxu0 0.0
    %413 = vmatpush1.msra.mxu0 %v385
    %414 = vmatprep.subr.mxu0 0.0
    %415 = vmatpush1.msra.mxu0 0.0
    %416 = vmatprep.subr.mxu0 0.0
    %417 = vmatpush1.msra.mxu0 0.0
    %418 = vmatprep.subr.mxu0 0.0
    %419 = vmatpush1.msra.mxu0 0.0
    %420 = vmatprep.subr.mxu0 0.0
    %421 = vmatpush1.msra.mxu0 0.0
    %422 = vmatprep.subr.mxu0 0.0
    %423 = vmatpush1.msra.mxu0 0.0
    %424 = vmatprep.subr.mxu0 0.0
    %425 = vmatpush1.msra.mxu0 0.0
    %426 = vmatprep.subr.mxu0 0.0
    %427 = vmatpush1.msra.mxu0 0.0
    %428 = vmatprep.subr.mxu0 0.0
    %429 = vmatpush1.msra.mxu0 0.0
    %430 = vmatprep.subr.mxu0 0.0
    %431 = vmatpush1.msra.mxu0 0.0
    %432 = vmatprep.subr.mxu0 0.0
    %433 = vmatpush1.msra.mxu0 0.0
    %434 = vmatprep.subr.mxu0 0.0
    %435 = vmatpush1.msra.mxu0 0.0
    %436 = vmatprep.subr.mxu0 0.0
    %437 = vmatpush1.msra.mxu0 0.0
    %438 = vmatprep.subr.mxu0 0.0
    %439 = vmatpush1.msra.mxu0 0.0
    %440 = vmatprep.subr.mxu0 0.0
    %441 = vmatpush1.msra.mxu0 0.0
    %442 = vmatprep.subr.mxu0 0.0
    %443 = vmatpush1.msra.mxu0 0.0
    %444 = vmatprep.subr.mxu0 0.0
    %445 = vmatpush1.msra.mxu0 0.0
    %446 = vmatprep.subr.mxu0 0.0
    %447 = vmatpush1.msra.mxu0 0.0
    %448 = vmatprep.subr.mxu0 0.0
    %449 = vmatpush1.msra.mxu0 0.0
    %450 = vmatprep.subr.mxu0 0.0
    %451 = vmatpush1.msra.mxu0 0.0
    %452 = vmatprep.subr.mxu0 0.0
    %453 = vmatpush1.msra.mxu0 0.0
    %454 = vmatprep.subr.mxu0 0.0
    %455 = vmatpush1.msra.mxu0 0.0
    %456 = vmatprep.subr.mxu0 0.0
    %457 = vmatpush1.msra.mxu0 0.0
    %458 = vmatprep.subr.mxu0 0.0
    %459 = vmatpush1.msra.mxu0 0.0
    %460 = vmatprep.subr.mxu0 0.0
    %461 = vmatpush1.msra.mxu0 0.0
    %462 = vmatprep.subr.mxu0 0.0
    %463 = vmatpush1.msra.mxu0 0.0
    %464 = vmatprep.subr.mxu0 0.0
    %465 = vmatpush1.msra.mxu0 0.0
    %466 = vmatprep.subr.mxu0 0.0
    %467 = vmatpush1.msra.mxu0 0.0
    %468 = vmatprep.subr.mxu0 0.0
    %469 = vmatpush1.msra.mxu0 0.0
    %470 = vmatprep.mubr.f32.mxu0 0.0
    %471 = vmatmul.mubr.f32.gmra.mrb[0].mxu0 %v395
    %v472 = vpop.f32.mrb[0].mxu0
    %v473 = vadd.f32 0.0, %v472
    %v474 = vpop.f32.mrb[0].mxu0
    %475 = vmatprep.mubr.f32.mxu0 0.0
    %476 = vmatmul.mubr.f32.gmra.mrb[0].mxu0 %v398
    %v477 = vpop.f32.mrb[0].mxu0
    %v478 = vadd.f32 0.0, %v477
    %v479 = vpop.f32.mrb[0].mxu0
    %480 = vmatprep.mubr.f32.mxu0 0.0
    %481 = vmatmul.mubr.f32.gmra.mrb[0].mxu0 %v401
    %v482 = vpop.f32.mrb[0].mxu0
    %v483 = vadd.f32 0.0, %v482
    %v484 = vpop.f32.mrb[0].mxu0
    %485 = vmatprep.mubr.f32.mxu0 0.0
    %486 = vmatmul.mubr.f32.gmra.mrb[0].mxu0 %v404
    %v487 = vpop.f32.mrb[0].mxu0
    %v488 = vadd.f32 0.0, %v487
    %v489 = vpop.f32.mrb[0].mxu0
    %490 = vdwg.mxu0
    %491 = vmatprep.subr.mxu0 0.0
    %492 = vmatpush1.msra.mxu0 %v153
    %493 = vmatprep.subr.mxu0 0.0
    %494 = vmatpush1.msra.mxu0 %v234
    %495 = vmatprep.subr.mxu0 0.0
    %496 = vmatpush1.msra.mxu0 %v309
    %497 = vmatprep.subr.mxu0 0.0
    %498 = vmatpush1.msra.mxu0 %v390
    %499 = vmatprep.subr.mxu0 0.0
    %500 = vmatpush1.msra.mxu0 0.0
    %501 = vmatprep.subr.mxu0 0.0
    %502 = vmatpush1.msra.mxu0 0.0
    %503 = vmatprep.subr.mxu0 0.0
    %504 = vmatpush1.msra.mxu0 0.0
    %505 = vmatprep.subr.mxu0 0.0
    %506 = vmatpush1.msra.mxu0 0.0
    %507 = vmatprep.subr.mxu0 0.0
    %508 = vmatpush1.msra.mxu0 0.0
    %509 = vmatprep.subr.mxu0 0.0
    %510 = vmatpush1.msra.mxu0 0.0
    %511 = vmatprep.subr.mxu0 0.0
    %512 = vmatpush1.msra.mxu0 0.0
    %513 = vmatprep.subr.mxu0 0.0
    %514 = vmatpush1.msra.mxu0 0.0
    %515 = vmatprep.subr.mxu0 0.0
    %516 = vmatpush1.msra.mxu0 0.0
    %517 = vmatprep.subr.mxu0 0.0
    %518 = vmatpush1.msra.mxu0 0.0
    %519 = vmatprep.subr.mxu0 0.0
    %520 = vmatpush1.msra.mxu0 0.0
    %521 = vmatprep.subr.mxu0 0.0
    %522 = vmatpush1.msra.mxu0 0.0
    %523 = vmatprep.subr.mxu0 0.0
    %524 = vmatpush1.msra.mxu0 0.0
    %525 = vmatprep.subr.mxu0 0.0
    %526 = vmatpush1.msra.mxu0 0.0
    %527 = vmatprep.subr.mxu0 0.0
    %528 = vmatpush1.msra.mxu0 0.0
    %529 = vmatprep.subr.mxu0 0.0
    %530 = vmatpush1.msra.mxu0 0.0
    %531 = vmatprep.subr.mxu0 0.0
    %532 = vmatpush1.msra.mxu0 0.0
    %533 = vmatprep.subr.mxu0 0.0
    %534 = vmatpush1.msra.mxu0 0.0
    %535 = vmatprep.subr.mxu0 0.0
    %536 = vmatpush1.msra.mxu0 0.0
    %537 = vmatprep.subr.mxu0 0.0
    %538 = vmatpush1.msra.mxu0 0.0
    %539 = vmatprep.subr.mxu0 0.0
    %540 = vmatpush1.msra.mxu0 0.0
    %541 = vmatprep.subr.mxu0 0.0
    %542 = vmatpush1.msra.mxu0 0.0
    %543 = vmatprep.subr.mxu0 0.0
    %544 = vmatpush1.msra.mxu0 0.0
    %545 = vmatprep.subr.mxu0 0.0
    %546 = vmatpush1.msra.mxu0 0.0
    %547 = vmatprep.subr.mxu0 0.0
    %548 = vmatpush1.msra.mxu0 0.0
    %549 = vmatprep.subr.mxu0 0.0
    %550 = vmatpush1.msra.mxu0 0.0
    %551 = vmatprep.subr.mxu0 0.0
    %552 = vmatpush1.msra.mxu0 0.0
    %553 = vmatprep.subr.mxu0 0.0
    %554 = vmatpush1.msra.mxu0 0.0
    %555 = vmatprep.mubr.f32.mxu0 0.0
    %556 = vmatmul.mubr.f32.gmra.mrb[0].mxu0 %v395
    %v557 = vpop.f32.mrb[0].mxu0
    %v558 = vadd.f32 0.0, %v557
    %v559 = vpop.f32.mrb[0].mxu0
    %560 = vmatprep.mubr.f32.mxu0 0.0
    %561 = vmatmul.mubr.f32.gmra.mrb[0].mxu0 %v398
    %v562 = vpop.f32.mrb[0].mxu0
    %v563 = vadd.f32 0.0, %v562
    %v564 = vpop.f32.mrb[0].mxu0
    %565 = vmatprep.mubr.f32.mxu0 0.0
    %566 = vmatmul.mubr.f32.gmra.mrb[0].mxu0 %v401
    %v567 = vpop.f32.mrb[0].mxu0
    %v568 = vadd.f32 0.0, %v567
    %v569 = vpop.f32.mrb[0].mxu0
    %570 = vmatprep.mubr.f32.mxu0 0.0
    %571 = vmatmul.mubr.f32.gmra.mrb[0].mxu0 %v404
    %v572 = vpop.f32.mrb[0].mxu0
    %v573 = vadd.f32 0.0, %v572
    %v574 = vpop.f32.mrb[0].mxu0
    %575 = vdwg.mxu0
    %v577 = vsel %vm68, %v473, 0
    %v580 = vsel %vm68, %v478, 0
    %v583 = vsel %vm68, %v483, 0
    %v586 = vsel %vm68, %v488, 0
    %v589 = vsel %vm68, %v558, 0
    %v592 = vsel %vm68, %v563, 0
    %v595 = vsel %vm68, %v568, 0
    %v598 = vsel %vm68, %v573, 0
    %600 = vmatprep.subr.mxu0 0.0
    %601 = vmatpush1.xpose.msra.mxu0 %v76
    %602 = vmatprep.subr.mxu0 0.0
    %603 = vmatpush1.xpose.msra.mxu0 %v79
    %604 = vmatprep.subr.mxu0 0.0
    %605 = vmatpush1.xpose.msra.mxu0 0.0
    %606 = vmatprep.subr.mxu0 0.0
    %607 = vmatpush1.xpose.msra.mxu0 0.0
    %608 = vmatprep.subr.mxu0 0.0
    %609 = vmatpush1.xpose.msra.mxu0 0.0
    %610 = vmatprep.subr.mxu0 0.0
    %611 = vmatpush1.xpose.msra.mxu0 0.0
    %612 = vmatprep.subr.mxu0 0.0
    %613 = vmatpush1.xpose.msra.mxu0 0.0
    %614 = vmatprep.subr.mxu0 0.0
    %615 = vmatpush1.xpose.msra.mxu0 0.0
    %616 = vmatprep.subr.mxu0 0.0
    %617 = vmatpush1.xpose.msra.mxu0 0.0
    %618 = vmatprep.subr.mxu0 0.0
    %619 = vmatpush1.xpose.msra.mxu0 0.0
    %620 = vmatprep.subr.mxu0 0.0
    %621 = vmatpush1.xpose.msra.mxu0 0.0
    %622 = vmatprep.subr.mxu0 0.0
    %623 = vmatpush1.xpose.msra.mxu0 0.0
    %624 = vmatprep.subr.mxu0 0.0
    %625 = vmatpush1.xpose.msra.mxu0 0.0
    %626 = vmatprep.subr.mxu0 0.0
    %627 = vmatpush1.xpose.msra.mxu0 0.0
    %628 = vmatprep.subr.mxu0 0.0
    %629 = vmatpush1.xpose.msra.mxu0 0.0
    %630 = vmatprep.subr.mxu0 0.0
    %631 = vmatpush1.xpose.msra.mxu0 0.0
    %632 = vmatprep.subr.mxu0 0.0
    %633 = vmatpush1.xpose.msra.mxu0 0.0
    %634 = vmatprep.subr.mxu0 0.0
    %635 = vmatpush1.xpose.msra.mxu0 0.0
    %636 = vmatprep.subr.mxu0 0.0
    %637 = vmatpush1.xpose.msra.mxu0 0.0
    %638 = vmatprep.subr.mxu0 0.0
    %639 = vmatpush1.xpose.msra.mxu0 0.0
    %640 = vmatprep.subr.mxu0 0.0
    %641 = vmatpush1.xpose.msra.mxu0 0.0
    %642 = vmatprep.subr.mxu0 0.0
    %643 = vmatpush1.xpose.msra.mxu0 0.0
    %644 = vmatprep.subr.mxu0 0.0
    %645 = vmatpush1.xpose.msra.mxu0 0.0
    %646 = vmatprep.subr.mxu0 0.0
    %647 = vmatpush1.xpose.msra.mxu0 0.0
    %648 = vmatprep.subr.mxu0 0.0
    %649 = vmatpush1.xpose.msra.mxu0 0.0
    %650 = vmatprep.subr.mxu0 0.0
    %651 = vmatpush1.xpose.msra.mxu0 0.0
    %652 = vmatprep.subr.mxu0 0.0
    %653 = vmatpush1.xpose.msra.mxu0 0.0
    %654 = vmatprep.subr.mxu0 0.0
    %655 = vmatpush1.xpose.msra.mxu0 0.0
    %656 = vmatprep.subr.mxu0 0.0
    %657 = vmatpush1.xpose.msra.mxu0 0.0
    %658 = vmatprep.subr.mxu0 0.0
    %659 = vmatpush1.xpose.msra.mxu0 0.0
    %660 = vmatprep.subr.mxu0 0.0
    %661 = vmatpush1.xpose.msra.mxu0 0.0
    %662 = vmatprep.subr.mxu0 0.0
    %663 = vmatpush1.xpose.msra.mxu0 0.0
    %664 = vmatprep.mubr.f32.mxu0 0.0
    %665 = vmatmul.mubr.f32.gmra.mrb[0].mxu0 %v577
    %v666 = vpop.f32.mrb[0].mxu0
    %v667 = vadd.f32 0.0, %v666
    %v668 = vpop.f32.mrb[0].mxu0
    %669 = vmatprep.mubr.f32.mxu0 0.0
    %670 = vmatmul.mubr.f32.gmra.mrb[0].mxu0 %v580
    %v671 = vpop.f32.mrb[0].mxu0
    %v672 = vadd.f32 0.0, %v671
    %v673 = vpop.f32.mrb[0].mxu0
    %674 = vmatprep.mubr.f32.mxu0 0.0
    %675 = vmatmul.mubr.f32.gmra.mrb[0].mxu0 %v583
    %v676 = vpop.f32.mrb[0].mxu0
    %v677 = vadd.f32 0.0, %v676
    %v678 = vpop.f32.mrb[0].mxu0
    %679 = vmatprep.mubr.f32.mxu0 0.0
    %680 = vmatmul.mubr.f32.gmra.mrb[0].mxu0 %v586
    %v681 = vpop.f32.mrb[0].mxu0
    %v682 = vadd.f32 0.0, %v681
    %v683 = vpop.f32.mrb[0].mxu0
    %684 = vmatprep.mubr.f32.mxu0 0.0
    %685 = vmatmul.mubr.f32.gmra.mrb[0].mxu0 %v589
    %v686 = vpop.f32.mrb[0].mxu0
    %v687 = vadd.f32 0.0, %v686
    %v688 = vpop.f32.mrb[0].mxu0
    %689 = vmatprep.mubr.f32.mxu0 0.0
    %690 = vmatmul.mubr.f32.gmra.mrb[0].mxu0 %v592
    %v691 = vpop.f32.mrb[0].mxu0
    %v692 = vadd.f32 0.0, %v691
    %v693 = vpop.f32.mrb[0].mxu0
    %694 = vmatprep.mubr.f32.mxu0 0.0
    %695 = vmatmul.mubr.f32.gmra.mrb[0].mxu0 %v595
    %v696 = vpop.f32.mrb[0].mxu0
    %v697 = vadd.f32 0.0, %v696
    %v698 = vpop.f32.mrb[0].mxu0
    %699 = vmatprep.mubr.f32.mxu0 0.0
    %700 = vmatmul.mubr.f32.gmra.mrb[0].mxu0 %v598
    %v701 = vpop.f32.mrb[0].mxu0
    %v702 = vadd.f32 0.0, %v701
    %v703 = vpop.f32.mrb[0].mxu0
    %704 = vdwg.mxu0
    %v706 = vsel %vm68, %v667, 0
    %v709 = vsel %vm68, %v672, 0
    %v712 = vsel %vm68, %v677, 0
    %v715 = vsel %vm68, %v682, 0
    %v718 = vsel %vm68, %v687, 0
    %v721 = vsel %vm68, %v692, 0
    %v724 = vsel %vm68, %v697, 0
    %v727 = vsel %vm68, %v702, 0
    %729 = vmatprep.subr.mxu0 0.0
    %730 = vmatpush1.xpose.msra.mxu0 %v76
    %731 = vmatprep.subr.mxu0 0.0
    %732 = vmatpush1.xpose.msra.mxu0 %v79
    %733 = vmatprep.subr.mxu0 0.0
    %734 = vmatpush1.xpose.msra.mxu0 0.0
    %735 = vmatprep.subr.mxu0 0.0
    %736 = vmatpush1.xpose.msra.mxu0 0.0
    %737 = vmatprep.subr.mxu0 0.0
    %738 = vmatpush1.xpose.msra.mxu0 0.0
    %739 = vmatprep.subr.mxu0 0.0
    %740 = vmatpush1.xpose.msra.mxu0 0.0
    %741 = vmatprep.subr.mxu0 0.0
    %742 = vmatpush1.xpose.msra.mxu0 0.0
    %743 = vmatprep.subr.mxu0 0.0
    %744 = vmatpush1.xpose.msra.mxu0 0.0
    %745 = vmatprep.subr.mxu0 0.0
    %746 = vmatpush1.xpose.msra.mxu0 0.0
    %747 = vmatprep.subr.mxu0 0.0
    %748 = vmatpush1.xpose.msra.mxu0 0.0
    %749 = vmatprep.subr.mxu0 0.0
    %750 = vmatpush1.xpose.msra.mxu0 0.0
    %751 = vmatprep.subr.mxu0 0.0
    %752 = vmatpush1.xpose.msra.mxu0 0.0
    %753 = vmatprep.subr.mxu0 0.0
    %754 = vmatpush1.xpose.msra.mxu0 0.0
    %755 = vmatprep.subr.mxu0 0.0
    %756 = vmatpush1.xpose.msra.mxu0 0.0
    %757 = vmatprep.subr.mxu0 0.0
    %758 = vmatpush1.xpose.msra.mxu0 0.0
    %759 = vmatprep.subr.mxu0 0.0
    %760 = vmatpush1.xpose.msra.mxu0 0.0
    %761 = vmatprep.subr.mxu0 0.0
    %762 = vmatpush1.xpose.msra.mxu0 0.0
    %763 = vmatprep.subr.mxu0 0.0
    %764 = vmatpush1.xpose.msra.mxu0 0.0
    %765 = vmatprep.subr.mxu0 0.0
    %766 = vmatpush1.xpose.msra.mxu0 0.0
    %767 = vmatprep.subr.mxu0 0.0
    %768 = vmatpush1.xpose.msra.mxu0 0.0
    %769 = vmatprep.subr.mxu0 0.0
    %770 = vmatpush1.xpose.msra.mxu0 0.0
    %771 = vmatprep.subr.mxu0 0.0
    %772 = vmatpush1.xpose.msra.mxu0 0.0
    %773 = vmatprep.subr.mxu0 0.0
    %774 = vmatpush1.xpose.msra.mxu0 0.0
    %775 = vmatprep.subr.mxu0 0.0
    %776 = vmatpush1.xpose.msra.mxu0 0.0
    %777 = vmatprep.subr.mxu0 0.0
    %778 = vmatpush1.xpose.msra.mxu0 0.0
    %779 = vmatprep.subr.mxu0 0.0
    %780 = vmatpush1.xpose.msra.mxu0 0.0
    %781 = vmatprep.subr.mxu0 0.0
    %782 = vmatpush1.xpose.msra.mxu0 0.0
    %783 = vmatprep.subr.mxu0 0.0
    %784 = vmatpush1.xpose.msra.mxu0 0.0
    %785 = vmatprep.subr.mxu0 0.0
    %786 = vmatpush1.xpose.msra.mxu0 0.0
    %787 = vmatprep.subr.mxu0 0.0
    %788 = vmatpush1.xpose.msra.mxu0 0.0
    %789 = vmatprep.subr.mxu0 0.0
    %790 = vmatpush1.xpose.msra.mxu0 0.0
    %791 = vmatprep.subr.mxu0 0.0
    %792 = vmatpush1.xpose.msra.mxu0 0.0
    %793 = vmatprep.mubr.f32.mxu0 0.0
    %794 = vmatmul.mubr.f32.gmra.mrb[0].mxu0 %v706
    %v795 = vpop.f32.mrb[0].mxu0
    %v796 = vadd.f32 0.0, %v795
    %v797 = vpop.f32.mrb[0].mxu0
    %798 = vmatprep.mubr.f32.mxu0 0.0
    %799 = vmatmul.mubr.f32.gmra.mrb[0].mxu0 %v709
    %v800 = vpop.f32.mrb[0].mxu0
    %v801 = vadd.f32 0.0, %v800
    %v802 = vpop.f32.mrb[0].mxu0
    %803 = vmatprep.mubr.f32.mxu0 0.0
    %804 = vmatmul.mubr.f32.gmra.mrb[0].mxu0 %v712
    %v805 = vpop.f32.mrb[0].mxu0
    %v806 = vadd.f32 0.0, %v805
    %v807 = vpop.f32.mrb[0].mxu0
    %808 = vmatprep.mubr.f32.mxu0 0.0
    %809 = vmatmul.mubr.f32.gmra.mrb[0].mxu0 %v715
    %v810 = vpop.f32.mrb[0].mxu0
    %v811 = vadd.f32 0.0, %v810
    %v812 = vpop.f32.mrb[0].mxu0
    %813 = vmatprep.mubr.f32.mxu0 0.0
    %814 = vmatmul.mubr.f32.gmra.mrb[0].mxu0 %v718
    %v815 = vpop.f32.mrb[0].mxu0
    %v816 = vadd.f32 0.0, %v815
    %v817 = vpop.f32.mrb[0].mxu0
    %818 = vmatprep.mubr.f32.mxu0 0.0
    %819 = vmatmul.mubr.f32.gmra.mrb[0].mxu0 %v721
    %v820 = vpop.f32.mrb[0].mxu0
    %v821 = vadd.f32 0.0, %v820
    %v822 = vpop.f32.mrb[0].mxu0
    %823 = vmatprep.mubr.f32.mxu0 0.0
    %824 = vmatmul.mubr.f32.gmra.mrb[0].mxu0 %v724
    %v825 = vpop.f32.mrb[0].mxu0
    %v826 = vadd.f32 0.0, %v825
    %v827 = vpop.f32.mrb[0].mxu0
    %828 = vmatprep.mubr.f32.mxu0 0.0
    %829 = vmatmul.mubr.f32.gmra.mrb[0].mxu0 %v727
    %v830 = vpop.f32.mrb[0].mxu0
    %v831 = vadd.f32 0.0, %v830
    %v832 = vpop.f32.mrb[0].mxu0
    %833 = vdwg.mxu0
    %834 = vmatprep.subr.mxu0 0.0
    %835 = vmatpush1.msra.mxu0 %v59
    %836 = vmatprep.subr.mxu0 0.0
    %837 = vmatpush1.msra.mxu0 %v60
    %838 = vmatprep.subr.mxu0 0.0
    %839 = vmatpush1.msra.mxu0 0.0
    %840 = vmatprep.subr.mxu0 0.0
    %841 = vmatpush1.msra.mxu0 0.0
    %842 = vmatprep.subr.mxu0 0.0
    %843 = vmatpush1.msra.mxu0 0.0
    %844 = vmatprep.subr.mxu0 0.0
    %845 = vmatpush1.msra.mxu0 0.0
    %846 = vmatprep.subr.mxu0 0.0
    %847 = vmatpush1.msra.mxu0 0.0
    %848 = vmatprep.subr.mxu0 0.0
    %849 = vmatpush1.msra.mxu0 0.0
    %850 = vmatprep.subr.mxu0 0.0
    %851 = vmatpush1.msra.mxu0 0.0
    %852 = vmatprep.subr.mxu0 0.0
    %853 = vmatpush1.msra.mxu0 0.0
    %854 = vmatprep.subr.mxu0 0.0
    %855 = vmatpush1.msra.mxu0 0.0
    %856 = vmatprep.subr.mxu0 0.0
    %857 = vmatpush1.msra.mxu0 0.0
    %858 = vmatprep.subr.mxu0 0.0
    %859 = vmatpush1.msra.mxu0 0.0
    %860 = vmatprep.subr.mxu0 0.0
    %861 = vmatpush1.msra.mxu0 0.0
    %862 = vmatprep.subr.mxu0 0.0
    %863 = vmatpush1.msra.mxu0 0.0
    %864 = vmatprep.subr.mxu0 0.0
    %865 = vmatpush1.msra.mxu0 0.0
    %866 = vmatprep.subr.mxu0 0.0
    %867 = vmatpush1.msra.mxu0 0.0
    %868 = vmatprep.subr.mxu0 0.0
    %869 = vmatpush1.msra.mxu0 0.0
    %870 = vmatprep.subr.mxu0 0.0
    %871 = vmatpush1.msra.mxu0 0.0
    %872 = vmatprep.subr.mxu0 0.0
    %873 = vmatpush1.msra.mxu0 0.0
    %874 = vmatprep.subr.mxu0 0.0
    %875 = vmatpush1.msra.mxu0 0.0
    %876 = vmatprep.subr.mxu0 0.0
    %877 = vmatpush1.msra.mxu0 0.0
    %878 = vmatprep.subr.mxu0 0.0
    %879 = vmatpush1.msra.mxu0 0.0
    %880 = vmatprep.subr.mxu0 0.0
    %881 = vmatpush1.msra.mxu0 0.0
    %882 = vmatprep.subr.mxu0 0.0
    %883 = vmatpush1.msra.mxu0 0.0
    %884 = vmatprep.subr.mxu0 0.0
    %885 = vmatpush1.msra.mxu0 0.0
    %886 = vmatprep.subr.mxu0 0.0
    %887 = vmatpush1.msra.mxu0 0.0
    %888 = vmatprep.subr.mxu0 0.0
    %889 = vmatpush1.msra.mxu0 0.0
    %890 = vmatprep.subr.mxu0 0.0
    %891 = vmatpush1.msra.mxu0 0.0
    %892 = vmatprep.subr.mxu0 0.0
    %893 = vmatpush1.msra.mxu0 0.0
    %894 = vmatprep.subr.mxu0 0.0
    %895 = vmatpush1.msra.mxu0 0.0
    %896 = vmatprep.subr.mxu0 0.0
    %897 = vmatpush1.msra.mxu0 0.0
    %898 = vmatprep.mubr.f32.mxu0 0.0
    %899 = vmatmul.mubr.f32.gmra.mrb[0].mxu0 %v577
    %v900 = vpop.f32.mrb[0].mxu0
    %v901 = vadd.f32 0.0, %v900
    %v902 = vpop.f32.mrb[0].mxu0
    %903 = vmatprep.mubr.f32.mxu0 0.0
    %904 = vmatmul.mubr.f32.gmra.mrb[0].mxu0 %v580
    %v905 = vpop.f32.mrb[0].mxu0
    %v906 = vadd.f32 0.0, %v905
    %v907 = vpop.f32.mrb[0].mxu0
    %908 = vmatprep.mubr.f32.mxu0 0.0
    %909 = vmatmul.mubr.f32.gmra.mrb[0].mxu0 %v583
    %v910 = vpop.f32.mrb[0].mxu0
    %v911 = vadd.f32 0.0, %v910
    %v912 = vpop.f32.mrb[0].mxu0
    %913 = vmatprep.mubr.f32.mxu0 0.0
    %914 = vmatmul.mubr.f32.gmra.mrb[0].mxu0 %v586
    %v915 = vpop.f32.mrb[0].mxu0
    %v916 = vadd.f32 0.0, %v915
    %v917 = vpop.f32.mrb[0].mxu0
    %918 = vmatprep.mubr.f32.mxu0 0.0
    %919 = vmatmul.mubr.f32.gmra.mrb[0].mxu0 %v589
    %v920 = vpop.f32.mrb[0].mxu0
    %v921 = vadd.f32 0.0, %v920
    %v922 = vpop.f32.mrb[0].mxu0
    %923 = vmatprep.mubr.f32.mxu0 0.0
    %924 = vmatmul.mubr.f32.gmra.mrb[0].mxu0 %v592
    %v925 = vpop.f32.mrb[0].mxu0
    %v926 = vadd.f32 0.0, %v925
    %v927 = vpop.f32.mrb[0].mxu0
    %928 = vmatprep.mubr.f32.mxu0 0.0
    %929 = vmatmul.mubr.f32.gmra.mrb[0].mxu0 %v595
    %v930 = vpop.f32.mrb[0].mxu0
    %v931 = vadd.f32 0.0, %v930
    %v932 = vpop.f32.mrb[0].mxu0
    %933 = vmatprep.mubr.f32.mxu0 0.0
    %934 = vmatmul.mubr.f32.gmra.mrb[0].mxu0 %v598
    %v935 = vpop.f32.mrb[0].mxu0
    %v936 = vadd.f32 0.0, %v935
    %v937 = vpop.f32.mrb[0].mxu0
    %938 = vdwg.mxu0
    %v940 = vsel %vm68, %v901, 0
    %v943 = vsel %vm68, %v906, 0
    %v946 = vsel %vm68, %v911, 0
    %v949 = vsel %vm68, %v916, 0
    %v952 = vsel %vm68, %v921, 0
    %v955 = vsel %vm68, %v926, 0
    %v958 = vsel %vm68, %v931, 0
    %v961 = vsel %vm68, %v936, 0
    %963 = vmatprep.subr.mxu0 0.0
    %964 = vmatpush1.msra.mxu0 %v59
    %965 = vmatprep.subr.mxu0 0.0
    %966 = vmatpush1.msra.mxu0 %v60
    %967 = vmatprep.subr.mxu0 0.0
    %968 = vmatpush1.msra.mxu0 0.0
    %969 = vmatprep.subr.mxu0 0.0
    %970 = vmatpush1.msra.mxu0 0.0
    %971 = vmatprep.subr.mxu0 0.0
    %972 = vmatpush1.msra.mxu0 0.0
    %973 = vmatprep.subr.mxu0 0.0
    %974 = vmatpush1.msra.mxu0 0.0
    %975 = vmatprep.subr.mxu0 0.0
    %976 = vmatpush1.msra.mxu0 0.0
    %977 = vmatprep.subr.mxu0 0.0
    %978 = vmatpush1.msra.mxu0 0.0
    %979 = vmatprep.subr.mxu0 0.0
    %980 = vmatpush1.msra.mxu0 0.0
    %981 = vmatprep.subr.mxu0 0.0
    %982 = vmatpush1.msra.mxu0 0.0
    %983 = vmatprep.subr.mxu0 0.0
    %984 = vmatpush1.msra.mxu0 0.0
    %985 = vmatprep.subr.mxu0 0.0
    %986 = vmatpush1.msra.mxu0 0.0
    %987 = vmatprep.subr.mxu0 0.0
    %988 = vmatpush1.msra.mxu0 0.0
    %989 = vmatprep.subr.mxu0 0.0
    %990 = vmatpush1.msra.mxu0 0.0
    %991 = vmatprep.subr.mxu0 0.0
    %992 = vmatpush1.msra.mxu0 0.0
    %993 = vmatprep.subr.mxu0 0.0
    %994 = vmatpush1.msra.mxu0 0.0
    %995 = vmatprep.subr.mxu0 0.0
    %996 = vmatpush1.msra.mxu0 0.0
    %997 = vmatprep.subr.mxu0 0.0
    %998 = vmatpush1.msra.mxu0 0.0
    %999 = vmatprep.subr.mxu0 0.0
    %1000 = vmatpush1.msra.mxu0 0.0
    %1001 = vmatprep.subr.mxu0 0.0
    %1002 = vmatpush1.msra.mxu0 0.0
    %1003 = vmatprep.subr.mxu0 0.0
    %1004 = vmatpush1.msra.mxu0 0.0
    %1005 = vmatprep.subr.mxu0 0.0
    %1006 = vmatpush1.msra.mxu0 0.0
    %1007 = vmatprep.subr.mxu0 0.0
    %1008 = vmatpush1.msra.mxu0 0.0
    %1009 = vmatprep.subr.mxu0 0.0
    %1010 = vmatpush1.msra.mxu0 0.0
    %1011 = vmatprep.subr.mxu0 0.0
    %1012 = vmatpush1.msra.mxu0 0.0
    %1013 = vmatprep.subr.mxu0 0.0
    %1014 = vmatpush1.msra.mxu0 0.0
    %1015 = vmatprep.subr.mxu0 0.0
    %1016 = vmatpush1.msra.mxu0 0.0
    %1017 = vmatprep.subr.mxu0 0.0
    %1018 = vmatpush1.msra.mxu0 0.0
    %1019 = vmatprep.subr.mxu0 0.0
    %1020 = vmatpush1.msra.mxu0 0.0
    %1021 = vmatprep.subr.mxu0 0.0
    %1022 = vmatpush1.msra.mxu0 0.0
    %1023 = vmatprep.subr.mxu0 0.0
    %1024 = vmatpush1.msra.mxu0 0.0
    %1025 = vmatprep.subr.mxu0 0.0
    %1026 = vmatpush1.msra.mxu0 0.0
    %1027 = vmatprep.mubr.f32.mxu0 0.0
    %1028 = vmatmul.mubr.f32.gmra.mrb[0].mxu0 %v940
    %v1029 = vpop.f32.mrb[0].mxu0
    %v1030 = vadd.f32 0.0, %v1029
    %v1031 = vpop.f32.mrb[0].mxu0
    %1032 = vmatprep.mubr.f32.mxu0 0.0
    %1033 = vmatmul.mubr.f32.gmra.mrb[0].mxu0 %v943
    %v1034 = vpop.f32.mrb[0].mxu0
    %v1035 = vadd.f32 0.0, %v1034
    %v1036 = vpop.f32.mrb[0].mxu0
    %1037 = vmatprep.mubr.f32.mxu0 0.0
    %1038 = vmatmul.mubr.f32.gmra.mrb[0].mxu0 %v946
    %v1039 = vpop.f32.mrb[0].mxu0
    %v1040 = vadd.f32 0.0, %v1039
    %v1041 = vpop.f32.mrb[0].mxu0
    %1042 = vmatprep.mubr.f32.mxu0 0.0
    %1043 = vmatmul.mubr.f32.gmra.mrb[0].mxu0 %v949
    %v1044 = vpop.f32.mrb[0].mxu0
    %v1045 = vadd.f32 0.0, %v1044
    %v1046 = vpop.f32.mrb[0].mxu0
    %1047 = vmatprep.mubr.f32.mxu0 0.0
    %1048 = vmatmul.mubr.f32.gmra.mrb[0].mxu0 %v952
    %v1049 = vpop.f32.mrb[0].mxu0
    %v1050 = vadd.f32 0.0, %v1049
    %v1051 = vpop.f32.mrb[0].mxu0
    %1052 = vmatprep.mubr.f32.mxu0 0.0
    %1053 = vmatmul.mubr.f32.gmra.mrb[0].mxu0 %v955
    %v1054 = vpop.f32.mrb[0].mxu0
    %v1055 = vadd.f32 0.0, %v1054
    %v1056 = vpop.f32.mrb[0].mxu0
    %1057 = vmatprep.mubr.f32.mxu0 0.0
    %1058 = vmatmul.mubr.f32.gmra.mrb[0].mxu0 %v958
    %v1059 = vpop.f32.mrb[0].mxu0
    %v1060 = vadd.f32 0.0, %v1059
    %v1061 = vpop.f32.mrb[0].mxu0
    %1062 = vmatprep.mubr.f32.mxu0 0.0
    %1063 = vmatmul.mubr.f32.gmra.mrb[0].mxu0 %v961
    %v1064 = vpop.f32.mrb[0].mxu0
    %v1065 = vadd.f32 0.0, %v1064
    %v1066 = vpop.f32.mrb[0].mxu0
    %1067 = vdwg.mxu0
    %1068 = vmatprep.subr.mxu0 0.0
    %1069 = vmatpush1.msra.mxu0 %v667
    %1070 = vmatprep.subr.mxu0 0.0
    %1071 = vmatpush1.msra.mxu0 %v672
    %1072 = vmatprep.subr.mxu0 0.0
    %1073 = vmatpush1.msra.mxu0 %v677
    %1074 = vmatprep.subr.mxu0 0.0
    %1075 = vmatpush1.msra.mxu0 %v682
    %1076 = vmatprep.subr.mxu0 0.0
    %1077 = vmatpush1.msra.mxu0 %v796
    %1078 = vmatprep.subr.mxu0 0.0
    %1079 = vmatpush1.msra.mxu0 %v801
    %1080 = vmatprep.subr.mxu0 0.0
    %1081 = vmatpush1.msra.mxu0 %v806
    %1082 = vmatprep.subr.mxu0 0.0
    %1083 = vmatpush1.msra.mxu0 %v811
    %1084 = vmatprep.subr.mxu0 0.0
    %1085 = vmatpush1.msra.mxu0 %v901
    %1086 = vmatprep.subr.mxu0 0.0
    %1087 = vmatpush1.msra.mxu0 %v906
    %1088 = vmatprep.subr.mxu0 0.0
    %1089 = vmatpush1.msra.mxu0 %v911
    %1090 = vmatprep.subr.mxu0 0.0
    %1091 = vmatpush1.msra.mxu0 %v916
    %1092 = vmatprep.subr.mxu0 0.0
    %1093 = vmatpush1.msra.mxu0 %v1030
    %1094 = vmatprep.subr.mxu0 0.0
    %1095 = vmatpush1.msra.mxu0 %v1035
    %1096 = vmatprep.subr.mxu0 0.0
    %1097 = vmatpush1.msra.mxu0 %v1040
    %1098 = vmatprep.subr.mxu0 0.0
    %1099 = vmatpush1.msra.mxu0 %v1045
    %1100 = vmatprep.subr.mxu0 0.0
    %1101 = vmatpush1.msra.mxu0 0.0
    %1102 = vmatprep.subr.mxu0 0.0
    %1103 = vmatpush1.msra.mxu0 0.0
    %1104 = vmatprep.subr.mxu0 0.0
    %1105 = vmatpush1.msra.mxu0 0.0
    %1106 = vmatprep.subr.mxu0 0.0
    %1107 = vmatpush1.msra.mxu0 0.0
    %1108 = vmatprep.subr.mxu0 0.0
    %1109 = vmatpush1.msra.mxu0 0.0
    %1110 = vmatprep.subr.mxu0 0.0
    %1111 = vmatpush1.msra.mxu0 0.0
    %1112 = vmatprep.subr.mxu0 0.0
    %1113 = vmatpush1.msra.mxu0 0.0
    %1114 = vmatprep.subr.mxu0 0.0
    %1115 = vmatpush1.msra.mxu0 0.0
    %1116 = vmatprep.subr.mxu0 0.0
    %1117 = vmatpush1.msra.mxu0 0.0
    %1118 = vmatprep.subr.mxu0 0.0
    %1119 = vmatpush1.msra.mxu0 0.0
    %1120 = vmatprep.subr.mxu0 0.0
    %1121 = vmatpush1.msra.mxu0 0.0
    %1122 = vmatprep.subr.mxu0 0.0
    %1123 = vmatpush1.msra.mxu0 0.0
    %1124 = vmatprep.subr.mxu0 0.0
    %1125 = vmatpush1.msra.mxu0 0.0
    %1126 = vmatprep.subr.mxu0 0.0
    %1127 = vmatpush1.msra.mxu0 0.0
    %1128 = vmatprep.subr.mxu0 0.0
    %1129 = vmatpush1.msra.mxu0 0.0
    %1130 = vmatprep.subr.mxu0 0.0
    %1131 = vmatpush1.msra.mxu0 0.0
    %1132 = vmatprep.mubr.f32.mxu0 0.0
    %1133 = vmatmul.mubr.f32.gmra.mrb[0].mxu0 %v67
    %v1134 = vpop.f32.mrb[0].mxu0
    %v1135 = vadd.f32 0.0, %v1134
    %v1136 = vpop.f32.mrb[0].mxu0
    %1137 = vdwg.mxu0
    %1138 = vmatprep.subr.mxu0 0.0
    %1139 = vmatpush1.msra.mxu0 %v687
    %1140 = vmatprep.subr.mxu0 0.0
    %1141 = vmatpush1.msra.mxu0 %v692
    %1142 = vmatprep.subr.mxu0 0.0
    %1143 = vmatpush1.msra.mxu0 %v697
    %1144 = vmatprep.subr.mxu0 0.0
    %1145 = vmatpush1.msra.mxu0 %v702
    %1146 = vmatprep.subr.mxu0 0.0
    %1147 = vmatpush1.msra.mxu0 %v816
    %1148 = vmatprep.subr.mxu0 0.0
    %1149 = vmatpush1.msra.mxu0 %v821
    %1150 = vmatprep.subr.mxu0 0.0
    %1151 = vmatpush1.msra.mxu0 %v826
    %1152 = vmatprep.subr.mxu0 0.0
    %1153 = vmatpush1.msra.mxu0 %v831
    %1154 = vmatprep.subr.mxu0 0.0
    %1155 = vmatpush1.msra.mxu0 %v921
    %1156 = vmatprep.subr.mxu0 0.0
    %1157 = vmatpush1.msra.mxu0 %v926
    %1158 = vmatprep.subr.mxu0 0.0
    %1159 = vmatpush1.msra.mxu0 %v931
    %1160 = vmatprep.subr.mxu0 0.0
    %1161 = vmatpush1.msra.mxu0 %v936
    %1162 = vmatprep.subr.mxu0 0.0
    %1163 = vmatpush1.msra.mxu0 %v1050
    %1164 = vmatprep.subr.mxu0 0.0
    %1165 = vmatpush1.msra.mxu0 %v1055
    %1166 = vmatprep.subr.mxu0 0.0
    %1167 = vmatpush1.msra.mxu0 %v1060
    %1168 = vmatprep.subr.mxu0 0.0
    %1169 = vmatpush1.msra.mxu0 %v1065
    %1170 = vmatprep.subr.mxu0 0.0
    %1171 = vmatpush1.msra.mxu0 0.0
    %1172 = vmatprep.subr.mxu0 0.0
    %1173 = vmatpush1.msra.mxu0 0.0
    %1174 = vmatprep.subr.mxu0 0.0
    %1175 = vmatpush1.msra.mxu0 0.0
    %1176 = vmatprep.subr.mxu0 0.0
    %1177 = vmatpush1.msra.mxu0 0.0
    %1178 = vmatprep.subr.mxu0 0.0
    %1179 = vmatpush1.msra.mxu0 0.0
    %1180 = vmatprep.subr.mxu0 0.0
    %1181 = vmatpush1.msra.mxu0 0.0
    %1182 = vmatprep.subr.mxu0 0.0
    %1183 = vmatpush1.msra.mxu0 0.0
    %1184 = vmatprep.subr.mxu0 0.0
    %1185 = vmatpush1.msra.mxu0 0.0
    %1186 = vmatprep.subr.mxu0 0.0
    %1187 = vmatpush1.msra.mxu0 0.0
    %1188 = vmatprep.subr.mxu0 0.0
    %1189 = vmatpush1.msra.mxu0 0.0
    %1190 = vmatprep.subr.mxu0 0.0
    %1191 = vmatpush1.msra.mxu0 0.0
    %1192 = vmatprep.subr.mxu0 0.0
    %1193 = vmatpush1.msra.mxu0 0.0
    %1194 = vmatprep.subr.mxu0 0.0
    %1195 = vmatpush1.msra.mxu0 0.0
    %1196 = vmatprep.subr.mxu0 0.0
    %1197 = vmatpush1.msra.mxu0 0.0
    %1198 = vmatprep.subr.mxu0 0.0
    %1199 = vmatpush1.msra.mxu0 0.0
    %1200 = vmatprep.subr.mxu0 0.0
    %1201 = vmatpush1.msra.mxu0 0.0
    %1202 = vmatprep.mubr.f32.mxu0 0.0
    %1203 = vmatmul.mubr.f32.gmra.mrb[0].mxu0 %v67
    %v1204 = vpop.f32.mrb[0].mxu0
    %v1205 = vadd.f32 0.0, %v1204
    %v1206 = vpop.f32.mrb[0].mxu0
    %1207 = vdwg.mxu0
    %1208 = vst.msk [vmem:[#allocation8] sm:$0xff] %vm68, %v1135
    %s1209 = scalar_lea.vmem [#allocation8], 8
    %1210 = vst.msk [vmem:[%s1209] sm:$0xff] %vm68, %v1205
    // Predicated region
    $region30: #{tpu_custom_call.1} parent=1 // pred_check
      _
    $region31: #{tpu_custom_call.1} parent=1 // pred_check_branch
      %1212 = sbr.rel (0) target = $region33
    $region32: #{tpu_custom_call.1} parent=1 // pred_region
      %s1214 = ssub.s32 256, 256
      %1215 = vsyncadd [#allocation4], %s1214
      %s1216 = sshll.u32 [#allocation8], 4
      %s1217 = int_to_ptr.vmem [resolvable:$true] %s1216
      %1222 = dma.vmem_to_hbm [thread:$0]  %s1217, 256, %s4, [#allocation4], 128, 128, 8
    $region33: #{tpu_custom_call.1} parent=1 // pred_fallthru
      _
    // Predicated region
    $region34: #{tpu_custom_call.1} parent=1 // pred_check
      _
    $region35: #{tpu_custom_call.1} parent=1 // pred_check_branch
      %1224 = sbr.rel (0) target = $region37
    $region36: #{tpu_custom_call.1} parent=1 // pred_region
      %1225 = dma.done [#allocation4], 256
    $region37: #{tpu_custom_call.1} parent=1 // pred_fallthru
      _
    %1226 = vsyncpa [#allocation3], 1
    %1227 = vsyncpa [#allocation6], 1
    %1228 = vsyncpa [#allocation4], 1

</llo_original>
